<compile_context>
chip_gen: v7x
topology: tpu7x:2x2x1
jax: 0.10.0
libtpu: 0.0.40
codegen_flags: <defaults>
</compile_context>

<pallas_src>
import jax
import jax.numpy as jnp
from jax.experimental import pallas as pl
from jax.experimental.pallas import tpu as pltpu  # noqa: F401  (TPU backend import)


def _identity_kernel(x_hbm_ref, o_hbm_ref):
    # Output buffer aliases the input buffer (input_output_aliases={0: 0}),
    # so the result is already in place.  True no-op body: no reads, no
    # writes, no DMA.  (Do NOT use pltpu.touch here — it has no discharge
    # rule and breaks interpret/HLO lowering.)
    del x_hbm_ref, o_hbm_ref


def no_frame_based_averaging(x):
    """Identity frame-based averaging: returns x unchanged (zero-copy Pallas call)."""
    return pl.pallas_call(
        _identity_kernel,
        out_shape=jax.ShapeDtypeStruct(x.shape, x.dtype),
        # Leave both operands where they are (HBM) — no pipelining, no VMEM.
        in_specs=[pl.BlockSpec(memory_space=pl.ANY)],
        out_specs=pl.BlockSpec(memory_space=pl.ANY),
        # Output 0 aliases input 0: the identity costs no HBM traffic.
        input_output_aliases={0: 0},
        # Advertise the call as free so XLA's scheduler keeps it off the
        # critical path.
        cost_estimate=pl.CostEstimate(flops=0, transcendentals=0, bytes_accessed=0),
    )(x)


if __name__ == "__main__":
    key = jax.random.PRNGKey(0)
    # NCHW-style input, small shape: batch=2, channels=4, H=16, W=16.
    x = jax.random.normal(key, (2, 4, 16, 16), dtype=jnp.float32)

    # (For production use, donate the argument — jax.jit(..., donate_argnums=0) —
    # so the alias takes effect with zero copies.  Not donated here so we can
    # still compare y against x below.)
    fwd = jax.jit(no_frame_based_averaging)
    y = jax.block_until_ready(fwd(x))

    assert y.shape == x.shape
    assert y.dtype == x.dtype
    assert jnp.array_equal(y, x)

    print("KERNEL_OK")
</pallas_src>

<mosaic_0001>
module attributes {stable_mosaic.version = 11 : i64} {
  func.func @_identity_kernel(%arg0: memref<2x4x16x16xf32, #tpu.memory_space<any>>, %arg1: memref<2x4x16x16xf32, #tpu.memory_space<any>>) attributes {dimension_semantics = [], scalar_prefetch = 0 : i64, scratch_operands = 0 : i64, tpu.core_type = #tpu.core_type<tc>} {
    return
  }
}

</mosaic_0001>

<llo_original>
// kernel: no_frame_based_averaging.1
$region0: #{no_frame_based_averaging.1}
  #allocation0 [shape = 'u32[]', space=smem, size = 0x4, offset = 0x4, fixed_abs, tag = 'smem constant byte address 0x4 - core index']
  #allocation1 [shape = 'u32[144,128]{1,0:T(1,128)}', space=vmem, size = 0x12000, scoped, tag = 'internal scratch']
  %s0 = inlined_call_operand.hbm [shape: f32[2,4,16,16], index: 0, kind: input, shape index: {}, may-alias: {0,1}]
  %s1 = inlined_call_operand.hbm [shape: f32[2,4,16,16], index: 1, kind: output, shape index: {}, may-alias: {0,1}]
  %s2 = sld [smem:[#allocation0]]
  $region2: #{no_frame_based_averaging.1} parent=0
    _
  %s4 = ssub.s32 1, %s2
  %s5 = scalar_select 0, %s4, %s2

</llo_original>
